<compile_context>
chip_gen: v5e
topology: v5e:2x2
jax: 0.10.0
libtpu: 0.0.40
codegen_flags: <defaults>
</compile_context>

<pallas_src>
import functools

import jax
import jax.numpy as jnp
from jax import lax
from jax.experimental import pallas as pl
from jax.experimental.pallas import tpu as pltpu


# ----------------------------- Pallas kernels --------------------------------

def xw_kernel(x_ref, w_ref, h_ref):
    # x_ref: (tm1, d_in) bf16, w_ref: (d_in, d_out_p) bf16, h_ref: (tm1, d_out_p) bf16
    h_ref[...] = jnp.dot(
        x_ref[...], w_ref[...], preferred_element_type=jnp.float32
    ).astype(h_ref.dtype)


def _mix_u32(x):
    # splitmix32 / lowbias32-style integer mixer: pure VPU int ops, portable everywhere.
    x = x ^ lax.shift_right_logical(x, jnp.uint32(16))
    x = x * jnp.uint32(0x7FEB352D)
    x = x ^ lax.shift_right_logical(x, jnp.uint32(15))
    x = x * jnp.uint32(0x846CA68B)
    x = x ^ lax.shift_right_logical(x, jnp.uint32(16))
    return x


def agg_kernel(seed_ref, adj_ref, h_ref, b_ref, out_ref, *, p, training, h_resident):
    # seed_ref: (1,) int32 in SMEM
    # adj_ref : (tm, tk)                 bf16 tile of Ahat
    # h_ref   : (tk, d_out_p) streamed   OR (n_pad, d_out_p) VMEM-resident, bf16
    # b_ref   : (1, d_out_p)             f32 bias
    # out_ref : (tm, d_out_p)            f32, block index invariant over k -> resident accumulator
    k = pl.program_id(1)
    last_k = pl.num_programs(1) - 1
    tm, d_out_p = out_ref.shape
    tk = adj_ref.shape[1]
    # IMPORTANT: program_id / SMEM reads only at the top level (not inside pl.when bodies):
    # the interpret-fallback path cannot lower program_id inside nested cond branches.
    row_base = pl.program_id(0) * tm
    seed_u32 = seed_ref[0].astype(jnp.uint32)

    @pl.when(k == 0)
    def _init():
        # Init the resident output block with the broadcast bias (epilogue add removed).
        out_ref[...] = jnp.broadcast_to(b_ref[...], out_ref.shape).astype(out_ref.dtype)

    if h_resident:
        # Full H lives in VMEM (fetched once); slice the k-th contraction chunk.
        h_tile = h_ref[pl.ds(k * tk, tk), :]
    else:
        h_tile = h_ref[...]

    out_ref[...] += jnp.dot(adj_ref[...], h_tile, preferred_element_type=jnp.float32)

    @pl.when(k == last_k)
    def _epilogue():
        y = jnp.maximum(out_ref[...], 0.0)  # ReLU
        if training and p > 0.0:
            # Inverted dropout with a stateless per-element hash:
            # keep iff hash(element_id, seed) >= p * 2^32  (keep prob = 1 - p).
            rows = (lax.broadcasted_iota(jnp.int32, y.shape, 0) + row_base).astype(jnp.uint32)
            cols = lax.broadcasted_iota(jnp.int32, y.shape, 1).astype(jnp.uint32)
            bits = _mix_u32(rows * jnp.uint32(d_out_p) + cols
                            + seed_u32 * jnp.uint32(0x9E3779B1))
            threshold = jnp.uint32(min(int(p * float(2 ** 32)), 2 ** 32 - 1))
            keep = bits >= threshold
            y = jnp.where(keep, y * (1.0 / (1.0 - p)), 0.0)
        out_ref[...] = y.astype(out_ref.dtype)


# ------------------------------- wrapper --------------------------------------

def _round_up(x, m):
    return ((x + m - 1) // m) * m


def _pad2d(a, r, c):
    return jnp.pad(a, ((0, r - a.shape[0]), (0, c - a.shape[1])))


def _pick_pow2_tile(n, pref, lo=128):
    t = pref
    while t > lo and t > n:
        t //= 2
    return t


def crd_forward(x, adj, w, b, seed, *, p, training, tm=None, tk=None):
    n, d_in = x.shape
    d_out = w.shape[1]

    # Tile selection (perf review): 256-512 power-of-two tiles so one node padding
    # divides every grid axis; keep >= 2 row tiles so "parallel" uses both v7x TCs.
    if tk is None:
        tk = _pick_pow2_tile(n, 512)
    if tm is None:
        tm = _pick_pow2_tile(n, 512)
    tm1 = _pick_pow2_tile(n, 512)          # kernel-1 row tile (few big steps)

    d_out_pad = _round_up(d_out, 128)      # lane-dense output features
    n_pad = _round_up(n, max(tm, tk, tm1))
    if n_pad // tm < 2 and n_pad // 2 >= 128:
        tm = n_pad // 2                    # two row tiles for megacore sharding

    xp = _pad2d(x, n_pad, d_in).astype(jnp.bfloat16)
    adjp = _pad2d(adj, n_pad, n_pad).astype(jnp.bfloat16)
    wp = _pad2d(w, d_in, d_out_pad).astype(jnp.bfloat16)
    bp = jnp.pad(b, (0, d_out_pad - d_out)).reshape(1, d_out_pad).astype(jnp.float32)

    # ---- kernel 1: H = X @ W  (computed once; large row tiles, W block-invariant) ----
    h = pl.pallas_call(
        xw_kernel,
        out_shape=jax.ShapeDtypeStruct((n_pad, d_out_pad), jnp.bfloat16),
        grid=(n_pad // tm1,),
        in_specs=[
            pl.BlockSpec((tm1, d_in), lambda i: (i, 0)),
            pl.BlockSpec((d_in, d_out_pad), lambda i: (0, 0)),
        ],
        out_specs=pl.BlockSpec((tm1, d_out_pad), lambda i: (i, 0)),
        compiler_params=pltpu.CompilerParams(dimension_semantics=("parallel",)),
    )(xp, wp)

    # ---- kernel 2: dropout(relu(Ahat @ H + b)), k-tiled reduction ----
    # Keep H fully VMEM-resident (fetched once) when it fits; otherwise stream per-k chunks.
    h_bytes = n_pad * d_out_pad * 2
    h_resident = h_bytes <= (16 << 20)

    adj_buf = 2 * tm * tk * 2                              # double-buffered bf16 adj tiles
    h_buf = h_bytes if h_resident else 2 * tk * d_out_pad * 2
    out_buf = 2 * tm * d_out_pad * 4                       # double-buffered f32 output
    vmem_limit = int(min(max(2 * (adj_buf + h_buf + out_buf) + (4 << 20), 32 << 20), 64 << 20))

    if h_resident:
        h_spec = pl.BlockSpec((n_pad, d_out_pad), lambda i, k: (0, 0))
    else:
        h_spec = pl.BlockSpec((tk, d_out_pad), lambda i, k: (k, 0))

    kernel = functools.partial(agg_kernel, p=float(p), training=bool(training),
                               h_resident=h_resident)
    out = pl.pallas_call(
        kernel,
        out_shape=jax.ShapeDtypeStruct((n_pad, d_out_pad), jnp.float32),
        grid=(n_pad // tm, n_pad // tk),
        in_specs=[
            pl.BlockSpec(memory_space=pltpu.MemorySpace.SMEM),    # seed (1,) int32
            pl.BlockSpec((tm, tk), lambda i, k: (i, k)),          # Ahat tile
            h_spec,                                               # H (resident or streamed)
            pl.BlockSpec((1, d_out_pad), lambda i, k: (0, 0)),    # bias
        ],
        out_specs=pl.BlockSpec((tm, d_out_pad), lambda i, k: (i, 0)),
        compiler_params=pltpu.CompilerParams(
            dimension_semantics=("parallel", "arbitrary"),
            vmem_limit_bytes=vmem_limit),
    )(seed, adjp, h, bp)

    return out[:n, :d_out]


# ------------------------------- JAX glue ------------------------------------

def gcn_normalized_adjacency(edge_index, num_nodes):
    """Dense Ahat = D^-1/2 (A + I) D^-1/2 matching PyG GCNConv normalization."""
    # TODO(synk): dense N^2 adjacency; a CSR/scalar-prefetch gather kernel would scale better.
    src = edge_index[0]
    dst = edge_index[1]
    loop = jnp.arange(num_nodes, dtype=edge_index.dtype)
    src = jnp.concatenate([src, loop])
    dst = jnp.concatenate([dst, loop])
    a = jnp.zeros((num_nodes, num_nodes), jnp.float32).at[dst, src].add(1.0)
    deg = a.sum(axis=1)
    d_inv_sqrt = jnp.where(deg > 0.0, 1.0 / jnp.sqrt(deg), 0.0)
    return d_inv_sqrt[:, None] * a * d_inv_sqrt[None, :]


def glorot(key, shape):
    fan_in, fan_out = shape
    limit = jnp.sqrt(6.0 / (fan_in + fan_out))
    return jax.random.uniform(key, shape, jnp.float32, -limit, limit)


def crd_reference(x, adj, w, b):
    """Pure-JAX reference for the eval-mode path (matches kernel's bf16 rounding)."""
    xb = x.astype(jnp.bfloat16).astype(jnp.float32)
    wb = w.astype(jnp.bfloat16).astype(jnp.float32)
    ab = adj.astype(jnp.bfloat16).astype(jnp.float32)
    h = (xb @ wb).astype(jnp.bfloat16).astype(jnp.float32)
    return jnp.maximum(ab @ h + b[None, :], 0.0)


# --------------------------------- main --------------------------------------

if __name__ == "__main__":
    key = jax.random.PRNGKey(0)
    k_x, k_e, k_w = jax.random.split(key, 3)

    # Small synthetic graph: N nodes, d_in -> d_out, dropout p.
    N, D_IN, D_OUT, E, P = 256, 64, 96, 1024, 0.5

    x = jax.random.normal(k_x, (N, D_IN), jnp.float32)
    edge_index = jax.random.randint(k_e, (2, E), 0, N, jnp.int32)

    # Deterministic GCNConv parameters (glorot weight, zero bias).
    w = glorot(k_w, (D_IN, D_OUT))
    b = jnp.zeros((D_OUT,), jnp.float32)

    adj = gcn_normalized_adjacency(edge_index, N)
    seed = jnp.array([1234], jnp.int32)

    # Eval-mode (dropout = identity): check against pure-JAX reference.
    out_eval = crd_forward(x, adj, w, b, seed, p=P, training=False)
    out_eval = jax.block_until_ready(out_eval)
    ref = crd_reference(x, adj, w, b)
    assert out_eval.shape == (N, D_OUT)
    assert jnp.allclose(out_eval, ref, atol=1e-2, rtol=1e-2), "mismatch vs reference"

    # Training-mode forward (module default): dropout fused in-kernel.
    out_train = crd_forward(x, adj, w, b, seed, p=P, training=True)
    out_train = jax.block_until_ready(out_train)
    assert out_train.shape == (N, D_OUT)

    # Dropout sanity: every entry is either dropped (0) or the eval value / (1-p).
    scale = 1.0 / (1.0 - P)
    ok = jnp.isclose(out_train, out_eval * scale, rtol=1e-5, atol=1e-6) | (out_train == 0.0)
    assert bool(jnp.all(ok)), "dropout produced unexpected values"
    pos = out_eval > 0.0
    kept_frac = jnp.sum(jnp.where(pos, out_train != 0.0, False)) / jnp.maximum(jnp.sum(pos), 1)
    assert abs(float(kept_frac) - (1.0 - P)) < 0.1, "dropout keep rate off"

    print("KERNEL_OK")
</pallas_src>

<mosaic_0001>
module attributes {stable_mosaic.version = 11 : i64} {
  func.func @xw_kernel(%arg0: i32, %arg1: memref<256x64xbf16, #tpu.memory_space<vmem>>, %arg2: memref<64x128xbf16, #tpu.memory_space<vmem>>, %arg3: memref<256x128xbf16, #tpu.memory_space<vmem>>) attributes {dimension_semantics = [#tpu.dimension_semantics<parallel>], iteration_bounds = array<i64: 1>, scalar_prefetch = 0 : i64, scratch_operands = 0 : i64, tpu.core_type = #tpu.core_type<tc>, window_params = [{transform_indices = @transform_0, window_bounds = array<i64: 256, 64>}, {pipeline_mode = #tpu.pipeline_mode<synchronous>, transform_indices = @transform_1, window_bounds = array<i64: 64, 128>}, {transform_indices = @transform_2, window_bounds = array<i64: 256, 128>}]} {
    %c0 = arith.constant 0 : index
    %c0_0 = arith.constant 0 : index
    %0 = vector.load %arg1[%c0, %c0_0] : memref<256x64xbf16, #tpu.memory_space<vmem>>, vector<256x64xbf16>
    %c0_1 = arith.constant 0 : index
    %c0_2 = arith.constant 0 : index
    %1 = vector.load %arg2[%c0_1, %c0_2] : memref<64x128xbf16, #tpu.memory_space<vmem>>, vector<64x128xbf16>
    %cst = arith.constant dense<0.000000e+00> : vector<256x128xf32>
    %2 = tpu.matmul %0, %1, %cst {dimension_numbers = #tpu.dot_dimension_numbers<[1], [0], [0], [1], [0, 0, 1, 1], [], []>} : vector<256x64xbf16>, vector<64x128xbf16>, vector<256x128xf32> -> vector<256x128xf32>
    %3 = arith.truncf %2 : vector<256x128xf32> to vector<256x128xbf16>
    %c0_3 = arith.constant 0 : index
    %c0_4 = arith.constant 0 : index
    %4 = vector.load %arg3[%c0_3, %c0_4] : memref<256x128xbf16, #tpu.memory_space<vmem>>, vector<256x128xbf16>
    tpu.vector_store %arg3[%c0_3, %c0_4], %3 {strides = array<i32>} : memref<256x128xbf16, #tpu.memory_space<vmem>>, vector<256x128xbf16>,
    return
  }
  func.func @transform_0(%arg0: i32) -> (i32, i32) {
    %c0_i32 = arith.constant 0 : i32
    %c0_i32_0 = arith.constant 0 : i32
    return %arg0, %c0_i32 : i32, i32
  }
  func.func @transform_1(%arg0: i32) -> (i32, i32) {
    %c0_i32 = arith.constant 0 : i32
    %c0_i32_0 = arith.constant 0 : i32
    %c0_i32_1 = arith.constant 0 : i32
    return %c0_i32, %c0_i32_0 : i32, i32
  }
  func.func @transform_2(%arg0: i32) -> (i32, i32) {
    %c0_i32 = arith.constant 0 : i32
    %c0_i32_0 = arith.constant 0 : i32
    return %arg0, %c0_i32 : i32, i32
  }
}

</mosaic_0001>

<llo_original>
// kernel: tpu_custom_call.1
$region0: #{tpu_custom_call.1}
  #allocation0 [shape = 'u32[]', space=smem, size = 0x4, offset = 0x4, fixed_abs, tag = 'smem constant byte address 0x4 - core index']
  #allocation1 [shape = 'u32[72,128]{1,0:T(1,128)}', space=vmem, size = 0x9000, scoped, tag = 'internal scratch']
  %s0 = inlined_call_operand.vmem [shape: bf16[256,64], index: 0, kind: input, shape index: {}]
  %s1 = inlined_call_operand.vmem [shape: bf16[64,128], index: 1, kind: input, shape index: {}]
  %s2 = inlined_call_operand.hbm [shape: bf16[256,128], index: 2, kind: output, shape index: {}]
  %s3 = sld [smem:[#allocation0]]
  $region18: #{tpu_custom_call.1} parent=0
    _
  %s5 = ssub.s32 1, %s3
  %s6 = scalar_select 0, %s5, %s3
  $region1: #{tpu_custom_call.1} parent=0
    #allocation2 [shape = 'u8[65536]{0}', space=vmem, size = 0x10000, scoped, tag = 'output window, operand 0, single buffered']
    #allocation3 [shape = 's32[1]{0}', space=sflag, size = 0x4, scoped, tag = 'scoped memory for tpu_custom_call.1']
    %7 = vsyncpa [#allocation3], 0
    // Predicated region
    $region2: #{tpu_custom_call.1} parent=1 // pred_check
      _
    $region3: #{tpu_custom_call.1} parent=1 // pred_check_branch
      %9 = sbr.rel (0) target = $region5
    $region4: #{tpu_custom_call.1} parent=1 // pred_region
      _
    $region5: #{tpu_custom_call.1} parent=1 // pred_fallthru
      _
    // Predicated region
    $region6: #{tpu_custom_call.1} parent=1 // pred_check
      _
    $region7: #{tpu_custom_call.1} parent=1 // pred_check_branch
      %11 = sbr.rel (0) target = $region9
    $region8: #{tpu_custom_call.1} parent=1 // pred_region
      _
    $region9: #{tpu_custom_call.1} parent=1 // pred_fallthru
      _
    %v13 = vld [vmem:[%s0] sm:$0xf]
    %v14 = vld [vmem:[%s0 + $0x4] sm:$0xf]
    %v15 = vld [vmem:[%s0 + $0x8] sm:$0xf]
    %v16 = vld [vmem:[%s0 + $0xc] sm:$0xf]
    %v17 = vld [vmem:[%s0 + $0x10] sm:$0xf]
    %v18 = vld [vmem:[%s0 + $0x14] sm:$0xf]
    %v19 = vld [vmem:[%s0 + $0x18] sm:$0xf]
    %v20 = vld [vmem:[%s0 + $0x1c] sm:$0xf]
    %v21 = vld [vmem:[%s0 + $0x20] sm:$0xf]
    %v22 = vld [vmem:[%s0 + $0x24] sm:$0xf]
    %v23 = vld [vmem:[%s0 + $0x28] sm:$0xf]
    %v24 = vld [vmem:[%s0 + $0x2c] sm:$0xf]
    %v25 = vld [vmem:[%s0 + $0x30] sm:$0xf]
    %v26 = vld [vmem:[%s0 + $0x34] sm:$0xf]
    %v27 = vld [vmem:[%s0 + $0x38] sm:$0xf]
    %v28 = vld [vmem:[%s0 + $0x3c] sm:$0xf]
    %v29 = vld [vmem:[%s0 + $0x40] sm:$0xf]
    %v30 = vld [vmem:[%s0 + $0x44] sm:$0xf]
    %v31 = vld [vmem:[%s0 + $0x48] sm:$0xf]
    %v32 = vld [vmem:[%s0 + $0x4c] sm:$0xf]
    %v33 = vld [vmem:[%s0 + $0x50] sm:$0xf]
    %v34 = vld [vmem:[%s0 + $0x54] sm:$0xf]
    %v35 = vld [vmem:[%s0 + $0x58] sm:$0xf]
    %v36 = vld [vmem:[%s0 + $0x5c] sm:$0xf]
    %v37 = vld [vmem:[%s0 + $0x60] sm:$0xf]
    %v38 = vld [vmem:[%s0 + $0x64] sm:$0xf]
    %v39 = vld [vmem:[%s0 + $0x68] sm:$0xf]
    %v40 = vld [vmem:[%s0 + $0x6c] sm:$0xf]
    %v41 = vld [vmem:[%s0 + $0x70] sm:$0xf]
    %v42 = vld [vmem:[%s0 + $0x74] sm:$0xf]
    %v43 = vld [vmem:[%s0 + $0x78] sm:$0xf]
    %v44 = vld [vmem:[%s0 + $0x7c] sm:$0xf]
    %v45 = vld [vmem:[%s1] sm:$0xf]
    %v46 = vld [vmem:[%s1 + $0x4] sm:$0xf]
    %v47 = vld [vmem:[%s1 + $0x8] sm:$0xf]
    %v48 = vld [vmem:[%s1 + $0xc] sm:$0xf]
    %v49 = vld [vmem:[%s1 + $0x10] sm:$0xf]
    %v50 = vld [vmem:[%s1 + $0x14] sm:$0xf]
    %v51 = vld [vmem:[%s1 + $0x18] sm:$0xf]
    %v52 = vld [vmem:[%s1 + $0x1c] sm:$0xf]
    %v85 = vunpack.c.l.b16 %v13
    %v86 = vunpack.c.l.b16 %v14
    %v87 = vunpack.c.l.b16 %v15
    %v88 = vunpack.c.l.b16 %v16
    %v89 = vunpack.c.l.b16 %v17
    %v90 = vunpack.c.l.b16 %v18
    %v91 = vunpack.c.l.b16 %v19
    %v92 = vunpack.c.l.b16 %v20
    %v93 = vunpack.c.l.b16 %v21
    %v94 = vunpack.c.l.b16 %v22
    %v95 = vunpack.c.l.b16 %v23
    %v96 = vunpack.c.l.b16 %v24
    %v97 = vunpack.c.l.b16 %v25
    %v98 = vunpack.c.l.b16 %v26
    %v99 = vunpack.c.l.b16 %v27
    %v100 = vunpack.c.l.b16 %v28
    %v101 = vunpack.c.l.b16 %v29
    %v102 = vunpack.c.l.b16 %v30
    %v103 = vunpack.c.l.b16 %v31
    %v104 = vunpack.c.l.b16 %v32
    %v105 = vunpack.c.l.b16 %v33
    %v106 = vunpack.c.l.b16 %v34
    %v107 = vunpack.c.l.b16 %v35
    %v108 = vunpack.c.l.b16 %v36
    %v109 = vunpack.c.l.b16 %v37
    %v110 = vunpack.c.l.b16 %v38
    %v111 = vunpack.c.l.b16 %v39
    %v112 = vunpack.c.l.b16 %v40
    %v113 = vunpack.c.l.b16 %v41
    %v114 = vunpack.c.l.b16 %v42
    %v115 = vunpack.c.l.b16 %v43
    %v116 = vunpack.c.l.b16 %v44
    %v117 = vpack.c.b16 %v86, %v85
    %v118 = vpack.c.b16 %v88, %v87
    %v119 = vpack.c.b16 %v90, %v89
    %v120 = vpack.c.b16 %v92, %v91
    %v121 = vpack.c.b16 %v94, %v93
    %v122 = vpack.c.b16 %v96, %v95
    %v123 = vpack.c.b16 %v98, %v97
    %v124 = vpack.c.b16 %v100, %v99
    %v125 = vpack.c.b16 %v102, %v101
    %v126 = vpack.c.b16 %v104, %v103
    %v127 = vpack.c.b16 %v106, %v105
    %v128 = vpack.c.b16 %v108, %v107
    %v129 = vpack.c.b16 %v110, %v109
    %v130 = vpack.c.b16 %v112, %v111
    %v131 = vpack.c.b16 %v114, %v113
    %v132 = vpack.c.b16 %v116, %v115
    %v141 = vunpack.c.l.b16 %v45
    %v142 = vunpack.c.l.b16 %v46
    %v143 = vunpack.c.l.b16 %v47
    %v144 = vunpack.c.l.b16 %v48
    %v145 = vunpack.c.l.b16 %v49
    %v146 = vunpack.c.l.b16 %v50
    %v147 = vunpack.c.l.b16 %v51
    %v148 = vunpack.c.l.b16 %v52
    %v149 = vpack.c.b16 %v142, %v141
    %v150 = vpack.c.b16 %v144, %v143
    %v151 = vpack.c.b16 %v146, %v145
    %v152 = vpack.c.b16 %v148, %v147
    %vm157 = vcmask 523264
    %v159 = vsel %vm157, %v117, 0
    %v162 = vsel %vm157, %v118, 0
    %v165 = vsel %vm157, %v119, 0
    %v168 = vsel %vm157, %v120, 0
    %v171 = vsel %vm157, %v121, 0
    %v174 = vsel %vm157, %v122, 0
    %v177 = vsel %vm157, %v123, 0
    %v180 = vsel %vm157, %v124, 0
    %v183 = vsel %vm157, %v125, 0
    %v186 = vsel %vm157, %v126, 0
    %v189 = vsel %vm157, %v127, 0
    %v192 = vsel %vm157, %v128, 0
    %v195 = vsel %vm157, %v129, 0
    %v198 = vsel %vm157, %v130, 0
    %v201 = vsel %vm157, %v131, 0
    %v204 = vsel %vm157, %v132, 0
    %206 = vmatpush.bf16.msra.mxu0 0
    %207 = vmatpush.bf16.msra.mxu0 0
    %208 = vmatpush.bf16.msra.mxu0 0
    %209 = vmatpush.bf16.msra.mxu0 0
    %210 = vmatpush.bf16.msra.mxu0 %v152
    %211 = vmatpush.bf16.msra.mxu0 %v151
    %212 = vmatpush.bf16.msra.mxu0 %v150
    %213 = vmatpush.bf16.msra.mxu0 %v149
    %214 = vmatmul.bf16.gmra.mxu0 %v159
    %v215 = vpop.f32.mrf.mxu0
    %v216 = vadd.f32 0.0, %v215
    %v217 = vpop.f32.mrf.mxu0
    %v218 = vadd.f32 0.0, %v217
    %219 = vmatmul.bf16.gmra.mxu0 %v162
    %v220 = vpop.f32.mrf.mxu0
    %v221 = vadd.f32 0.0, %v220
    %v222 = vpop.f32.mrf.mxu0
    %v223 = vadd.f32 0.0, %v222
    %224 = vmatmul.bf16.gmra.mxu0 %v165
    %v225 = vpop.f32.mrf.mxu0
    %v226 = vadd.f32 0.0, %v225
    %v227 = vpop.f32.mrf.mxu0
    %v228 = vadd.f32 0.0, %v227
    %229 = vmatmul.bf16.gmra.mxu0 %v168
    %v230 = vpop.f32.mrf.mxu0
    %v231 = vadd.f32 0.0, %v230
    %v232 = vpop.f32.mrf.mxu0
    %v233 = vadd.f32 0.0, %v232
    %234 = vmatmul.bf16.gmra.mxu0 %v171
    %v235 = vpop.f32.mrf.mxu0
    %v236 = vadd.f32 0.0, %v235
    %v237 = vpop.f32.mrf.mxu0
    %v238 = vadd.f32 0.0, %v237
    %239 = vmatmul.bf16.gmra.mxu0 %v174
    %v240 = vpop.f32.mrf.mxu0
    %v241 = vadd.f32 0.0, %v240
    %v242 = vpop.f32.mrf.mxu0
    %v243 = vadd.f32 0.0, %v242
    %244 = vmatmul.bf16.gmra.mxu0 %v177
    %v245 = vpop.f32.mrf.mxu0
    %v246 = vadd.f32 0.0, %v245
    %v247 = vpop.f32.mrf.mxu0
    %v248 = vadd.f32 0.0, %v247
    %249 = vmatmul.bf16.gmra.mxu0 %v180
    %v250 = vpop.f32.mrf.mxu0
    %v251 = vadd.f32 0.0, %v250
    %v252 = vpop.f32.mrf.mxu0
    %v253 = vadd.f32 0.0, %v252
    %254 = vmatmul.bf16.gmra.mxu0 %v183
    %v255 = vpop.f32.mrf.mxu0
    %v256 = vadd.f32 0.0, %v255
    %v257 = vpop.f32.mrf.mxu0
    %v258 = vadd.f32 0.0, %v257
    %259 = vmatmul.bf16.gmra.mxu0 %v186
    %v260 = vpop.f32.mrf.mxu0
    %v261 = vadd.f32 0.0, %v260
    %v262 = vpop.f32.mrf.mxu0
    %v263 = vadd.f32 0.0, %v262
    %264 = vmatmul.bf16.gmra.mxu0 %v189
    %v265 = vpop.f32.mrf.mxu0
    %v266 = vadd.f32 0.0, %v265
    %v267 = vpop.f32.mrf.mxu0
    %v268 = vadd.f32 0.0, %v267
    %269 = vmatmul.bf16.gmra.mxu0 %v192
    %v270 = vpop.f32.mrf.mxu0
    %v271 = vadd.f32 0.0, %v270
    %v272 = vpop.f32.mrf.mxu0
    %v273 = vadd.f32 0.0, %v272
    %274 = vmatmul.bf16.gmra.mxu0 %v195
    %v275 = vpop.f32.mrf.mxu0
    %v276 = vadd.f32 0.0, %v275
    %v277 = vpop.f32.mrf.mxu0
    %v278 = vadd.f32 0.0, %v277
    %279 = vmatmul.bf16.gmra.mxu0 %v198
    %v280 = vpop.f32.mrf.mxu0
    %v281 = vadd.f32 0.0, %v280
    %v282 = vpop.f32.mrf.mxu0
    %v283 = vadd.f32 0.0, %v282
    %284 = vmatmul.bf16.gmra.mxu0 %v201
    %v285 = vpop.f32.mrf.mxu0
    %v286 = vadd.f32 0.0, %v285
    %v287 = vpop.f32.mrf.mxu0
    %v288 = vadd.f32 0.0, %v287
    %289 = vmatmul.bf16.gmra.mxu0 %v204
    %v290 = vpop.f32.mrf.mxu0
    %v291 = vadd.f32 0.0, %v290
    %v292 = vpop.f32.mrf.mxu0
    %v293 = vadd.f32 0.0, %v292
    %294 = vdwg.mxu0
    %v295 = vpack.c.bf16 %v216, %v216
    %v296 = vpack.c.bf16 %v218, %v218
    %v297 = vpack.c.bf16 %v221, %v221
    %v298 = vpack.c.bf16 %v223, %v223
    %v299 = vpack.c.bf16 %v226, %v226
    %v300 = vpack.c.bf16 %v228, %v228
    %v301 = vpack.c.bf16 %v231, %v231
    %v302 = vpack.c.bf16 %v233, %v233
    %v303 = vpack.c.bf16 %v236, %v236
    %v304 = vpack.c.bf16 %v238, %v238
    %v305 = vpack.c.bf16 %v241, %v241
    %v306 = vpack.c.bf16 %v243, %v243
    %v307 = vpack.c.bf16 %v246, %v246
    %v308 = vpack.c.bf16 %v248, %v248
    %v309 = vpack.c.bf16 %v251, %v251
    %v310 = vpack.c.bf16 %v253, %v253
    %v311 = vpack.c.bf16 %v256, %v256
    %v312 = vpack.c.bf16 %v258, %v258
    %v313 = vpack.c.bf16 %v261, %v261
    %v314 = vpack.c.bf16 %v263, %v263
    %v315 = vpack.c.bf16 %v266, %v266
    %v316 = vpack.c.bf16 %v268, %v268
    %v317 = vpack.c.bf16 %v271, %v271
    %v318 = vpack.c.bf16 %v273, %v273
    %v319 = vpack.c.bf16 %v276, %v276
    %v320 = vpack.c.bf16 %v278, %v278
    %v321 = vpack.c.bf16 %v281, %v281
    %v322 = vpack.c.bf16 %v283, %v283
    %v323 = vpack.c.bf16 %v286, %v286
    %v324 = vpack.c.bf16 %v288, %v288
    %v325 = vpack.c.bf16 %v291, %v291
    %v326 = vpack.c.bf16 %v293, %v293
    %327 = vst [vmem:[#allocation2] sm:$0xf] %v295
    %328 = vst [vmem:[#allocation2 + $0x4] sm:$0xf] %v296
    %329 = vst [vmem:[#allocation2 + $0x8] sm:$0xf] %v297
    %330 = vst [vmem:[#allocation2 + $0xc] sm:$0xf] %v298
    %331 = vst [vmem:[#allocation2 + $0x10] sm:$0xf] %v299
    %332 = vst [vmem:[#allocation2 + $0x14] sm:$0xf] %v300
    %333 = vst [vmem:[#allocation2 + $0x18] sm:$0xf] %v301
    %334 = vst [vmem:[#allocation2 + $0x1c] sm:$0xf] %v302
    %335 = vst [vmem:[#allocation2 + $0x20] sm:$0xf] %v303
    %336 = vst [vmem:[#allocation2 + $0x24] sm:$0xf] %v304
    %337 = vst [vmem:[#allocation2 + $0x28] sm:$0xf] %v305
    %338 = vst [vmem:[#allocation2 + $0x2c] sm:$0xf] %v306
    %339 = vst [vmem:[#allocation2 + $0x30] sm:$0xf] %v307
    %340 = vst [vmem:[#allocation2 + $0x34] sm:$0xf] %v308
    %341 = vst [vmem:[#allocation2 + $0x38] sm:$0xf] %v309
    %342 = vst [vmem:[#allocation2 + $0x3c] sm:$0xf] %v310
    %343 = vst [vmem:[#allocation2 + $0x40] sm:$0xf] %v311
    %344 = vst [vmem:[#allocation2 + $0x44] sm:$0xf] %v312
    %345 = vst [vmem:[#allocation2 + $0x48] sm:$0xf] %v313
    %346 = vst [vmem:[#allocation2 + $0x4c] sm:$0xf] %v314
    %347 = vst [vmem:[#allocation2 + $0x50] sm:$0xf] %v315
    %348 = vst [vmem:[#allocation2 + $0x54] sm:$0xf] %v316
    %349 = vst [vmem:[#allocation2 + $0x58] sm:$0xf] %v317
    %350 = vst [vmem:[#allocation2 + $0x5c] sm:$0xf] %v318
    %351 = vst [vmem:[#allocation2 + $0x60] sm:$0xf] %v319
    %352 = vst [vmem:[#allocation2 + $0x64] sm:$0xf] %v320
    %353 = vst [vmem:[#allocation2 + $0x68] sm:$0xf] %v321
    %354 = vst [vmem:[#allocation2 + $0x6c] sm:$0xf] %v322
    %355 = vst [vmem:[#allocation2 + $0x70] sm:$0xf] %v323
    %356 = vst [vmem:[#allocation2 + $0x74] sm:$0xf] %v324
    %357 = vst [vmem:[#allocation2 + $0x78] sm:$0xf] %v325
    %358 = vst [vmem:[#allocation2 + $0x7c] sm:$0xf] %v326
    // Predicated region
    $region10: #{tpu_custom_call.1} parent=1 // pred_check
      _
    $region11: #{tpu_custom_call.1} parent=1 // pred_check_branch
      %360 = sbr.rel (0) target = $region13
    $region12: #{tpu_custom_call.1} parent=1 // pred_region
      %362 = vsyncadd [#allocation3], 0
      %s363 = sshll.u32 [#allocation2], 4
      %s364 = int_to_ptr.vmem [resolvable:$true] %s363
      %s365 = sshll.u32 %s2, 4
      %s366 = int_to_ptr.hbm [resolvable:$true] %s365
      %371 = dma.vmem_to_hbm [thread:$0]  %s364, 2048, %s366, [#allocation3], 64, 64, 4
    $region13: #{tpu_custom_call.1} parent=1 // pred_fallthru
      _
    // Predicated region
    $region14: #{tpu_custom_call.1} parent=1 // pred_check
      _
    $region15: #{tpu_custom_call.1} parent=1 // pred_check_branch
      %373 = sbr.rel (0) target = $region17
    $region16: #{tpu_custom_call.1} parent=1 // pred_region
      %375 = dma.done [#allocation3], 2048
    $region17: #{tpu_custom_call.1} parent=1 // pred_fallthru
      _
    %376 = vsyncpa [#allocation3], 1

</llo_original>
